<compile_context>
chip_gen: v7x
topology: tpu7x:2x2x1
jax: 0.10.0
libtpu: 0.0.40
codegen_flags: <defaults>
</compile_context>

<pallas_src>
import functools

import jax
import jax.numpy as jnp
from jax.experimental import pallas as pl
from jax.experimental.pallas import tpu as pltpu


# ---------------------------------------------------------------------------
# Kernel
# ---------------------------------------------------------------------------
def _bent_relu_kernel(x_ref, o_ref, *, threshold_x):
    x = x_ref[...]
    y = jnp.maximum(x, jnp.zeros_like(x))                     # relu
    t = jnp.asarray(threshold_x, dtype=y.dtype)
    # In-dtype t * 0.5 keeps this path bit-consistent with the jnp fallback.
    o_ref[...] = jnp.where(y < t, y * 0.5, y - t * 0.5)


# ---------------------------------------------------------------------------
# Tiling / wrapper
# ---------------------------------------------------------------------------
_LANE_CANDIDATES = (4096, 2048, 1024, 512, 256, 128)
# 8 MiB blocks: in+out double-buffered -> 32 MiB resident.
_TARGET_BLOCK_BYTES = 8 * 1024 * 1024
# Below this total size, tiling into multiple blocks buys nothing.
_MIN_SPLIT_BYTES = 2 * 1024 * 1024
# 4 * block_bytes + margin; well under v7x's 64 MiB physical VMEM.
_VMEM_LIMIT_BYTES = 40 << 20


def _choose_tiling(rows, lane, itemsize):
    """Pick (tile_rows, num_blocks) for a (rows, lane) slab."""
    # dtype-aware row granularity: f32 -> 8, bf16 -> 16, int8/fp8 -> 32.
    pack = max(1, 4 // itemsize) * 8
    total_bytes = rows * lane * itemsize
    if rows <= pack or total_bytes <= _MIN_SPLIT_BYTES:
        # Single full-extent block (legal for any rows value).
        return rows, 1

    row_bytes = lane * itemsize
    max_tile_rows = max(pack, ((_TARGET_BLOCK_BYTES // row_bytes) // pack) * pack)
    num_blocks = pl.cdiv(rows, max_tile_rows)
    # Even block count >= 2 so v7x's two TensorCores both contribute with
    # balanced load (harmless on single-TC chips: per-step overhead is tiny).
    if num_blocks < 2:
        num_blocks = 2
    if num_blocks % 2:
        num_blocks += 1
    tile_rows = pl.cdiv(rows, num_blocks)
    tile_rows = max(pack, pl.cdiv(tile_rows, pack) * pack)   # <= max_tile_rows
    return tile_rows, pl.cdiv(rows, tile_rows)


def _bent_relu_2d(x2d, threshold_x):
    """Run the Pallas kernel on a lane-dense (rows, lane) slab."""
    rows, lane = x2d.shape
    itemsize = x2d.dtype.itemsize
    tile_rows, grid_len = _choose_tiling(rows, lane, itemsize)
    n = rows * lane
    kernel = functools.partial(_bent_relu_kernel, threshold_x=float(threshold_x))

    return pl.pallas_call(
        kernel,
        out_shape=jax.ShapeDtypeStruct((rows, lane), x2d.dtype),
        grid_spec=pltpu.PrefetchScalarGridSpec(
            num_scalar_prefetch=0,
            grid=(grid_len,),
            in_specs=[pl.BlockSpec((tile_rows, lane), lambda i: (i, 0))],
            out_specs=pl.BlockSpec((tile_rows, lane), lambda i: (i, 0)),
        ),
        compiler_params=pltpu.CompilerParams(
            dimension_semantics=("parallel",),
            vmem_limit_bytes=_VMEM_LIMIT_BYTES,
        ),
        input_output_aliases={0: 0},
        cost_estimate=pl.CostEstimate(
            flops=5 * n,
            transcendentals=0,
            bytes_accessed=2 * n * itemsize,
        ),
    )(x2d)


def _bent_relu_jnp(x, threshold_x):
    """Plain fused-XLA path (tiny inputs / lane-unfriendly element counts)."""
    y = jnp.maximum(x, jnp.zeros_like(x))
    t = jnp.asarray(threshold_x, dtype=y.dtype)
    return jnp.where(y < t, y * 0.5, y - t * 0.5)


def bent_relu_pallas(x, threshold_x, *, min_pallas_elements=65536):
    """Apply BentReLU elementwise to an arbitrary-shaped array."""
    orig_shape = x.shape
    n = x.size
    if n == 0:
        return x

    if n < min_pallas_elements:
        # Tiny activation: fused XLA elementwise is already at roofline.
        return _bent_relu_jnp(x, threshold_x)

    # Widest lane width dividing n exactly -> zero-copy reshape, unmasked stores.
    lane = None
    for cand in _LANE_CANDIDATES:
        if n % cand == 0:
            lane = cand
            break

    if lane is None:
        # n not a multiple of 128: the old pad+concat fallback cost a full extra
        # HBM copy; XLA's fused elementwise is strictly better here.
        return _bent_relu_jnp(x, threshold_x)

    out2d = _bent_relu_2d(x.reshape(n // lane, lane), threshold_x)
    return out2d.reshape(orig_shape)


class BentReLU:
    """JAX/Pallas port of the PyTorch BentReLU module."""

    def __init__(self, threshold_x):
        self.threshold_x = float(threshold_x)

    def __call__(self, x):
        return bent_relu_pallas(x, self.threshold_x)


def _reference_bent_relu(x, threshold_x):
    y = jnp.maximum(x, jnp.zeros_like(x))
    t = jnp.asarray(threshold_x, dtype=y.dtype)
    return jnp.where(y < t, y * 0.5, y - t * 0.5)


# ---------------------------------------------------------------------------
# Self-test
# ---------------------------------------------------------------------------
if __name__ == "__main__":
    key = jax.random.PRNGKey(0)
    threshold_x = 1.0
    module = BentReLU(threshold_x)

    # 1) Small NCHW input consistent with the module (takes the jnp fast path).
    x_small = jax.random.normal(key, (2, 4, 16, 16), dtype=jnp.float32) * 2.0
    out_small = jax.block_until_ready(module(x_small))
    ref_small = _reference_bent_relu(x_small, threshold_x)
    assert out_small.shape == x_small.shape
    assert out_small.dtype == x_small.dtype
    assert jnp.allclose(out_small, ref_small, atol=1e-6, rtol=1e-6)

    # 2) Same small input forced through the Pallas kernel (single-block path).
    out_forced = jax.block_until_ready(
        bent_relu_pallas(x_small, threshold_x, min_pallas_elements=0))
    assert jnp.allclose(out_forced, ref_small, atol=1e-6, rtol=1e-6)

    # 3) Medium f32 activation exercising the tiled path: 8*65*64*64 elems ->
    #    520 rows of 4096, even grid=(2,) with a ragged second block.
    k1, k2 = jax.random.split(key)
    x_med = jax.random.normal(k1, (8, 65, 64, 64), dtype=jnp.float32) * 2.0
    out_med = jax.block_until_ready(
        bent_relu_pallas(x_med, threshold_x, min_pallas_elements=0))
    assert jnp.allclose(out_med, _reference_bent_relu(x_med, threshold_x),
                        atol=1e-6, rtol=1e-6)

    # 4) bf16 activation exercising the dtype-aware (16-row) tiling.
    x_bf16 = (jax.random.normal(k1, (8, 65, 64, 64), dtype=jnp.float32) * 2.0
              ).astype(jnp.bfloat16)
    out_bf16 = jax.block_until_ready(
        bent_relu_pallas(x_bf16, threshold_x, min_pallas_elements=0))
    assert out_bf16.dtype == jnp.bfloat16
    assert jnp.allclose(out_bf16.astype(jnp.float32),
                        _reference_bent_relu(x_bf16, threshold_x).astype(jnp.float32),
                        atol=1e-2, rtol=1e-2)

    # 5) Element count not a multiple of 128 (jnp fallback path, no padding copy).
    x_odd = jax.random.normal(k2, (3, 5, 7, 11), dtype=jnp.float32) * 2.0
    out_odd = jax.block_until_ready(
        bent_relu_pallas(x_odd, threshold_x, min_pallas_elements=0))
    assert out_odd.shape == x_odd.shape
    assert jnp.allclose(out_odd, _reference_bent_relu(x_odd, threshold_x),
                        atol=1e-6, rtol=1e-6)

    print("KERNEL_OK")
</pallas_src>

<mosaic_0001>
module attributes {stable_mosaic.version = 11 : i64} {
  func.func @_bent_relu_kernel(%arg0: i32, %arg1: memref<1x2048xf32, #tpu.memory_space<vmem>>, %arg2: memref<1x2048xf32, #tpu.memory_space<vmem>>) attributes {dimension_semantics = [#tpu.dimension_semantics<parallel>], iteration_bounds = array<i64: 1>, scalar_prefetch = 0 : i64, scratch_operands = 0 : i64, tpu.core_type = #tpu.core_type<tc>, window_params = [{transform_indices = @transform_0, window_bounds = array<i64: 1, 2048>}, {transform_indices = @transform_1, window_bounds = array<i64: 1, 2048>}]} {
    %c0 = arith.constant 0 : index
    %c0_0 = arith.constant 0 : index
    %0 = vector.load %arg1[%c0, %c0_0] : memref<1x2048xf32, #tpu.memory_space<vmem>>, vector<1x2048xf32>
    %cst = arith.constant 0.000000e+00 : f32
    %1 = vector.broadcast %cst : f32 to vector<1x2048xf32>
    %2 = arith.maximumf %0, %1 : vector<1x2048xf32>
    %cst_1 = arith.constant 1.000000e+00 : f32
    %3 = vector.broadcast %cst_1 : f32 to vector<1x2048xf32>
    %4 = arith.cmpf olt, %2, %3 : vector<1x2048xf32>
    %cst_2 = arith.constant 5.000000e-01 : f32
    %5 = vector.broadcast %cst_2 : f32 to vector<1x2048xf32>
    %6 = arith.mulf %2, %5 : vector<1x2048xf32>
    %cst_3 = arith.constant 1.000000e+00 : f32
    %cst_4 = arith.constant 5.000000e-01 : f32
    %7 = arith.mulf %cst_3, %cst_4 : f32
    %8 = vector.broadcast %7 : f32 to vector<1x2048xf32>
    %9 = arith.subf %2, %8 : vector<1x2048xf32>
    %10 = arith.select %4, %6, %9 : vector<1x2048xi1>, vector<1x2048xf32>
    %c0_5 = arith.constant 0 : index
    %c0_6 = arith.constant 0 : index
    %11 = vector.load %arg2[%c0_5, %c0_6] : memref<1x2048xf32, #tpu.memory_space<vmem>>, vector<1x2048xf32>
    tpu.vector_store %arg2[%c0_5, %c0_6], %10 {strides = array<i32>} : memref<1x2048xf32, #tpu.memory_space<vmem>>, vector<1x2048xf32>,
    return
  }
  func.func @transform_0(%arg0: i32) -> (i32, i32) {
    %c0_i32 = arith.constant 0 : i32
    %c0_i32_0 = arith.constant 0 : i32
    return %arg0, %c0_i32 : i32, i32
  }
  func.func @transform_1(%arg0: i32) -> (i32, i32) {
    %c0_i32 = arith.constant 0 : i32
    %c0_i32_0 = arith.constant 0 : i32
    return %arg0, %c0_i32 : i32, i32
  }
}

</mosaic_0001>

<llo_original>
// kernel: tpu_custom_call.1
$region0: #{tpu_custom_call.1}
  #allocation0 [shape = 'u32[]', space=smem, size = 0x4, offset = 0x4, fixed_abs, tag = 'smem constant byte address 0x4 - core index']
  #allocation1 [shape = 'u32[144,128]{1,0:T(1,128)}', space=vmem, size = 0x12000, scoped, tag = 'internal scratch']
  %s0 = inlined_call_operand.hbm [shape: f32[1,2048], index: 0, kind: input, shape index: {}, may-alias: {0,1}]
  %s1 = inlined_call_operand.hbm [shape: f32[1,2048], index: 1, kind: output, shape index: {}, may-alias: {0,1}]
  %s2 = sld [smem:[#allocation0]]
  $region18: #{tpu_custom_call.1} parent=0
    _
  %s4 = ssub.s32 1, %s2
  %s5 = scalar_select 0, %s4, %s2
  $region1: #{tpu_custom_call.1} parent=0
    #allocation2 [shape = 'u8[8192]{0}', space=vmem, size = 0x2000, scoped, tag = 'input window, operand 0, single buffered']
    #allocation3 [shape = 's32[1]{0}', space=sflag, size = 0x4, scoped, tag = 'scoped memory for tpu_custom_call.1']
    #allocation4 [shape = 's32[1]{0}', space=sflag, size = 0x4, scoped, tag = 'scoped memory for tpu_custom_call.1']
    #allocation5 [shape = 'u8[8192]{0}', space=vmem, size = 0x2000, scoped, tag = 'output window, operand 0, single buffered']
    %6 = vsyncpa [#allocation3], 0
    %7 = vsyncpa [#allocation4], 0
    // Predicated region
    $region2: #{tpu_custom_call.1} parent=1 // pred_check
      _
    $region3: #{tpu_custom_call.1} parent=1 // pred_check_branch
      %9 = sbr.rel (0) target = $region5
    $region4: #{tpu_custom_call.1} parent=1 // pred_region
      %s11 = ssub.s32 256, 256
      %12 = vsyncadd [#allocation3], %s11
      %s14 = sshll.u32 [#allocation2], 4
      %s15 = int_to_ptr.vmem [resolvable:$true] %s14
      %17 = dma.hbm_to_vmem [thread:$0]  %s0, 256, %s15, [#allocation3]
    $region5: #{tpu_custom_call.1} parent=1 // pred_fallthru
      _
    // Predicated region
    $region6: #{tpu_custom_call.1} parent=1 // pred_check
      _
    $region7: #{tpu_custom_call.1} parent=1 // pred_check_branch
      %19 = sbr.rel (0) target = $region9
    $region8: #{tpu_custom_call.1} parent=1 // pred_region
      %20 = dma.done [#allocation3], 256
    $region9: #{tpu_custom_call.1} parent=1 // pred_fallthru
      _
    %v21 = vld [vmem:[#allocation2] sm:$0xff]
    %v22 = vld [vmem:[#allocation2 + $0x8] sm:$0xff]
    %v23 = vmax.f32 %v21, 0.0
    %v24 = vmax.f32 %v22, 0.0
    %vm25 = vcmp.lt.f32.partialorder %v23, 1.0
    %vm26 = vcmp.lt.f32.partialorder %v24, 1.0
    %v27 = vmul.f32 %v23, 0.5
    %v28 = vmul.f32 %v24, 0.5
    %v29 = vsub.f32 %v23, 0.5
    %v30 = vsub.f32 %v24, 0.5
    %v31 = vsel %vm25, %v27, %v29
    %v32 = vsel %vm26, %v28, %v30
    %33 = vst [vmem:[#allocation5] sm:$0xff] %v31
    %34 = vst [vmem:[#allocation5 + $0x8] sm:$0xff] %v32
    // Predicated region
    $region10: #{tpu_custom_call.1} parent=1 // pred_check
      _
    $region11: #{tpu_custom_call.1} parent=1 // pred_check_branch
      %36 = sbr.rel (0) target = $region13
    $region12: #{tpu_custom_call.1} parent=1 // pred_region
      %s38 = ssub.s32 256, 256
      %39 = vsyncadd [#allocation4], %s38
      %s41 = sshll.u32 [#allocation5], 4
      %s42 = int_to_ptr.vmem [resolvable:$true] %s41
      %44 = dma.vmem_to_hbm [thread:$0]  %s42, 256, %s1, [#allocation4]
    $region13: #{tpu_custom_call.1} parent=1 // pred_fallthru
      _
    // Predicated region
    $region14: #{tpu_custom_call.1} parent=1 // pred_check
      _
    $region15: #{tpu_custom_call.1} parent=1 // pred_check_branch
      %46 = sbr.rel (0) target = $region17
    $region16: #{tpu_custom_call.1} parent=1 // pred_region
      %47 = dma.done [#allocation4], 256
    $region17: #{tpu_custom_call.1} parent=1 // pred_fallthru
      _
    %48 = vsyncpa [#allocation3], 1
    %49 = vsyncpa [#allocation4], 1

</llo_original>
